<compile_context>
chip_gen: v5e
topology: v5e:2x2
jax: 0.10.0
libtpu: 0.0.40
codegen_flags: <defaults>
</compile_context>

<pallas_src>
import jax
import jax.numpy as jnp
from jax.experimental import pallas as pl
from jax.experimental.pallas import tpu as pltpu


def _round_up(x, m):
    return ((x + m - 1) // m) * m


def _vmem_capacity():
    try:
        return int(pltpu.get_tpu_info().vmem_capacity_bytes)
    except Exception:
        return 128 * 1024 * 1024


def _choose_tm(rows):
    """Row tile: minimize padding, keep MXU M filled, >=2 tiles for megacore."""
    rows8 = _round_up(rows, 8)
    if rows8 <= 8:
        return 8
    if rows8 <= 512:
        # Split into two 8-aligned row tiles (v7x has 2 TensorCores; the extra
        # grid step is negligible on single-core v5e/v6e).
        return _round_up(rows8 // 2, 8)
    # Many rows: large tiles for MXU efficiency, pick the one wasting least.
    return min((512, 256, 128), key=lambda t: (_round_up(rows8, t), -t))


def _choose_tf(d_ff_p, target):
    """Largest 128-multiple divisor of d_ff_p that is <= target."""
    n = d_ff_p // 128
    t = max(1, target // 128)
    best = 1
    for d in range(1, n + 1):
        if n % d == 0 and d <= t:
            best = d
    return best * 128


def _plan(rows, d_model_p, d_ff_p, out_itemsize, vmem_cap, tf_max=None):
    """Pick (tm, tf, vmem_limit). tf == d_ff_p means the weight-resident path."""
    tm = _choose_tm(rows)
    vmem_limit = int(vmem_cap * 0.8)      # ~100 MiB on v5e/v6e, ~51 MiB on v7x
    budget = int(vmem_cap * 0.7)          # headroom for compiler scratch

    def tiled_need(tm_, tf_):
        return (2 * 2 * d_model_p * tf_ * 2          # w1+w2 slices, 2 buffers, bf16
                + 2 * tm_ * d_model_p * 2            # x tile, 2 buffers, bf16
                + 2 * tm_ * d_model_p * out_itemsize # out tile, 2 buffers
                + tm_ * d_model_p * 4                # f32 accumulator
                + tm_ * tf_ * 4                      # fc1 activation slice (f32)
                + (tf_ + d_model_p) * 4)             # biases

    if tf_max is None or tf_max >= d_ff_p:
        resident_need = (2 * 2 * d_model_p * d_ff_p * 2   # both weights (2 bufs), bf16
                         + 2 * tm * d_model_p * 2
                         + 2 * tm * d_model_p * out_itemsize
                         + tm * d_ff_p * 4
                         + (d_ff_p + d_model_p) * 4)
        if resident_need <= budget:
            return tm, d_ff_p, vmem_limit

    tf_cap = d_ff_p if tf_max is None else min(int(tf_max), d_ff_p)
    tm_cur = tm
    while True:
        for target in (512, 384, 256, 128):
            tf = _choose_tf(d_ff_p, min(target, tf_cap))
            if tiled_need(tm_cur, tf) <= budget:
                return tm_cur, tf, vmem_limit
        if tm_cur <= 8:
            return 8, _choose_tf(d_ff_p, min(128, tf_cap)), vmem_limit
        tm_cur = max(8, _round_up(tm_cur // 2, 8))


# ----------------------------- kernels ------------------------------------


def _ffn_kernel_resident(x_ref, w1_ref, b1_ref, w2_ref, b2_ref, o_ref):
    # Full weights live in VMEM (constant block index) across all row tiles.
    h = jnp.dot(x_ref[...], w1_ref[...], preferred_element_type=jnp.float32)
    h = jnp.maximum(h + b1_ref[...], 0.0)
    y = jnp.dot(h.astype(w2_ref.dtype), w2_ref[...],
                preferred_element_type=jnp.float32)
    o_ref[...] = (y + b2_ref[...]).astype(o_ref.dtype)


def _ffn_kernel_tiled(x_ref, w1_ref, b1_ref, w2_ref, b2_ref, o_ref, acc_ref):
    # d_ff reduction axis is the trailing "arbitrary" grid dim.  Only used
    # when num_programs(1) >= 2 (otherwise the resident kernel is used).
    k = pl.program_id(1)
    nk = pl.num_programs(1)

    h = jnp.dot(x_ref[...], w1_ref[...], preferred_element_type=jnp.float32)
    h = jnp.maximum(h + b1_ref[...], 0.0)
    partial = jnp.dot(h.astype(w2_ref.dtype), w2_ref[...],
                      preferred_element_type=jnp.float32)

    @pl.when(k == 0)
    def _():
        acc_ref[...] = partial                      # init by assignment

    @pl.when(jnp.logical_and(k > 0, k < nk - 1))
    def _():
        acc_ref[...] += partial

    @pl.when(k == nk - 1)
    def _():
        # Fuse the last partial into the finalize: no extra acc RMW.
        o_ref[...] = (acc_ref[...] + partial + b2_ref[...]).astype(o_ref.dtype)


# --------------------------- pallas_call wrappers ---------------------------


def _call_resident(x_p, w1_p, b1_p, w2_p, b2_p, *, tm, out_dtype, vmem_limit):
    rows_p, d_model_p = x_p.shape
    d_ff_p = w1_p.shape[1]
    return pl.pallas_call(
        _ffn_kernel_resident,
        out_shape=jax.ShapeDtypeStruct((rows_p, d_model_p), out_dtype),
        grid_spec=pltpu.PrefetchScalarGridSpec(
            num_scalar_prefetch=0,
            grid=(rows_p // tm,),
            in_specs=[
                pl.BlockSpec((tm, d_model_p), lambda i: (i, 0)),      # x rows
                pl.BlockSpec((d_model_p, d_ff_p), lambda i: (0, 0)),  # w1 (resident)
                pl.BlockSpec((1, d_ff_p), lambda i: (0, 0)),          # b1
                pl.BlockSpec((d_ff_p, d_model_p), lambda i: (0, 0)),  # w2 (resident)
                pl.BlockSpec((1, d_model_p), lambda i: (0, 0)),       # b2
            ],
            out_specs=pl.BlockSpec((tm, d_model_p), lambda i: (i, 0)),
        ),
        compiler_params=pltpu.CompilerParams(
            dimension_semantics=("parallel",),
            vmem_limit_bytes=vmem_limit,
        ),
    )(x_p, w1_p, b1_p, w2_p, b2_p)


def _call_tiled(x_p, w1_p, b1_p, w2_p, b2_p, *, tm, tf, out_dtype, vmem_limit):
    rows_p, d_model_p = x_p.shape
    d_ff_p = w1_p.shape[1]
    grid = (rows_p // tm, d_ff_p // tf)
    return pl.pallas_call(
        _ffn_kernel_tiled,
        out_shape=jax.ShapeDtypeStruct((rows_p, d_model_p), out_dtype),
        grid_spec=pltpu.PrefetchScalarGridSpec(
            num_scalar_prefetch=0,
            grid=grid,
            in_specs=[
                pl.BlockSpec((tm, d_model_p), lambda i, k: (i, 0)),   # x rows
                pl.BlockSpec((d_model_p, tf), lambda i, k: (0, k)),   # w1 slice
                pl.BlockSpec((1, tf), lambda i, k: (0, k)),           # b1 slice
                pl.BlockSpec((tf, d_model_p), lambda i, k: (k, 0)),   # w2 slice
                pl.BlockSpec((1, d_model_p), lambda i, k: (0, 0)),    # b2
            ],
            out_specs=pl.BlockSpec((tm, d_model_p), lambda i, k: (i, 0)),
            scratch_shapes=[pltpu.VMEM((tm, d_model_p), jnp.float32)],
        ),
        compiler_params=pltpu.CompilerParams(
            dimension_semantics=("parallel", "arbitrary"),
            vmem_limit_bytes=vmem_limit,
        ),
    )(x_p, w1_p, b1_p, w2_p, b2_p)


# ------------------------------- public API ---------------------------------


def prepare_ffn_params(w1, b1, w2, b2, compute_dtype=jnp.bfloat16):
    """Pad (lane-dense) + cast parameters ONCE; reuse the result across calls.

    Weights are stored transposed vs. torch nn.Linear:
      w1: (d_model, d_ff), w2: (d_ff, d_model).
    Padding is mathematically inert (zero rows/cols and zero bias).
    """
    d_model, d_ff = w1.shape
    d_model_p = _round_up(d_model, 128)
    d_ff_p = _round_up(d_ff, 128)
    w1_p = jnp.zeros((d_model_p, d_ff_p), compute_dtype).at[:d_model, :d_ff].set(
        w1.astype(compute_dtype))
    w2_p = jnp.zeros((d_ff_p, d_model_p), compute_dtype).at[:d_ff, :d_model].set(
        w2.astype(compute_dtype))
    b1_p = jnp.zeros((1, d_ff_p), jnp.float32).at[0, :d_ff].set(
        b1.astype(jnp.float32))
    b2_p = jnp.zeros((1, d_model_p), jnp.float32).at[0, :d_model].set(
        b2.astype(jnp.float32))
    return w1_p, b1_p, w2_p, b2_p


def ffn_apply(x, w1_p, b1_p, w2_p, b2_p, *, d_model,
              compute_dtype=jnp.bfloat16, tf_max=None):
    """x: (..., d_model) -> (..., d_model) using pre-padded parameters."""
    orig_shape = x.shape
    out_dtype = x.dtype
    d_model_p, d_ff_p = w1_p.shape

    x2 = x.reshape(-1, d_model)
    rows = x2.shape[0]

    tm, tf, vmem_limit = _plan(rows, d_model_p, d_ff_p,
                               jnp.dtype(out_dtype).itemsize,
                               _vmem_capacity(), tf_max=tf_max)
    rows_p = _round_up(rows, tm)

    needs_pad = (rows_p != rows) or (d_model_p != d_model)
    if needs_pad:
        x_p = jnp.zeros((rows_p, d_model_p), compute_dtype).at[
            :rows, :d_model].set(x2.astype(compute_dtype))
    else:
        x_p = x2.astype(compute_dtype)   # no padding copy when already aligned

    if tf >= d_ff_p:
        out = _call_resident(x_p, w1_p, b1_p, w2_p, b2_p, tm=tm,
                             out_dtype=out_dtype, vmem_limit=vmem_limit)
    else:
        out = _call_tiled(x_p, w1_p, b1_p, w2_p, b2_p, tm=tm, tf=tf,
                          out_dtype=out_dtype, vmem_limit=vmem_limit)

    if needs_pad:
        out = out[:rows, :d_model]
    return out.reshape(orig_shape)


class PositionWiseFeedForward:
    """y = fc2(relu(fc1(x))).  Weights padded/cast once at construction."""

    def __init__(self, w1, b1, w2, b2, compute_dtype=jnp.bfloat16):
        self.d_model = int(w1.shape[0])
        self.compute_dtype = compute_dtype
        self.params = prepare_ffn_params(w1, b1, w2, b2, compute_dtype)

    def __call__(self, x, tf_max=None):
        return ffn_apply(x, *self.params, d_model=self.d_model,
                         compute_dtype=self.compute_dtype, tf_max=tf_max)


def position_wise_feed_forward(x, w1, b1, w2, b2, *,
                               compute_dtype=jnp.bfloat16, tf_max=None):
    """One-shot convenience wrapper (pads weights on every call; prefer the
    class / prepare_ffn_params for repeated use)."""
    params = prepare_ffn_params(w1, b1, w2, b2, compute_dtype)
    return ffn_apply(x, *params, d_model=int(w1.shape[0]),
                     compute_dtype=compute_dtype, tf_max=tf_max)


if __name__ == "__main__":
    key = jax.random.PRNGKey(0)

    def make_params(kw, d_model, d_ff):
        kw1, kb1, kw2, kb2 = jax.random.split(kw, 4)
        bound1 = 1.0 / (d_model ** 0.5)
        bound2 = 1.0 / (d_ff ** 0.5)
        # Stored transposed relative to torch's (out, in) so the kernel does x @ w.
        w1 = jax.random.uniform(kw1, (d_model, d_ff), jnp.float32, -bound1, bound1)
        b1 = jax.random.uniform(kb1, (d_ff,), jnp.float32, -bound1, bound1)
        w2 = jax.random.uniform(kw2, (d_ff, d_model), jnp.float32, -bound2, bound2)
        b2 = jax.random.uniform(kb2, (d_model,), jnp.float32, -bound2, bound2)
        return w1, b1, w2, b2

    def check(y, x, w1, b1, w2, b2):
        f32 = jnp.float32
        bf = lambda a: a.astype(jnp.bfloat16).astype(f32)
        # Reference matching the kernel's compute recipe (bf16 matmul inputs,
        # f32 accumulation / bias / ReLU).
        h_ref = jnp.maximum(bf(x) @ bf(w1) + b1, 0.0)
        ref = bf(h_ref) @ bf(w2) + b2
        assert jnp.allclose(y, ref, atol=1e-3, rtol=1e-3)
        # Loose check against the pure-f32 module semantics.
        ref_f32 = jnp.maximum(x @ w1 + b1, 0.0) @ w2 + b2
        assert jnp.allclose(y, ref_f32, atol=5e-2, rtol=5e-2)

    k1, k2, kx = jax.random.split(key, 3)

    # --- Test 1: weight-resident path (small d_ff) ---
    batch, seq, d_model, d_ff = 2, 8, 32, 64
    x = jax.random.normal(kx, (batch, seq, d_model), dtype=jnp.float32)
    w1, b1, w2, b2 = make_params(k1, d_model, d_ff)
    ffn = PositionWiseFeedForward(w1, b1, w2, b2)
    y = ffn(x)
    jax.block_until_ready(y)
    assert y.shape == x.shape
    check(y, x, w1, b1, w2, b2)

    # --- Test 2: tiled d_ff reduction path (forced via tf_max) ---
    d_ff2 = 256
    w1b, b1b, w2b, b2b = make_params(k2, d_model, d_ff2)
    y2 = position_wise_feed_forward(x, w1b, b1b, w2b, b2b, tf_max=128)
    jax.block_until_ready(y2)
    assert y2.shape == x.shape
    check(y2, x, w1b, b1b, w2b, b2b)

    print("KERNEL_OK")
</pallas_src>

<mosaic_0001>
module attributes {stable_mosaic.version = 11 : i64} {
  func.func @_ffn_kernel_resident(%arg0: i32, %arg1: memref<8x128xbf16, #tpu.memory_space<vmem>>, %arg2: memref<128x128xbf16, #tpu.memory_space<vmem>>, %arg3: memref<1x128xf32, #tpu.memory_space<vmem>>, %arg4: memref<128x128xbf16, #tpu.memory_space<vmem>>, %arg5: memref<1x128xf32, #tpu.memory_space<vmem>>, %arg6: memref<8x128xf32, #tpu.memory_space<vmem>>) attributes {dimension_semantics = [#tpu.dimension_semantics<parallel>], iteration_bounds = array<i64: 2>, scalar_prefetch = 0 : i64, scratch_operands = 0 : i64, tpu.core_type = #tpu.core_type<tc>, window_params = [{transform_indices = @transform_0, window_bounds = array<i64: 8, 128>}, {pipeline_mode = #tpu.pipeline_mode<synchronous>, transform_indices = @transform_1, window_bounds = array<i64: 128, 128>}, {pipeline_mode = #tpu.pipeline_mode<synchronous>, transform_indices = @transform_2, window_bounds = array<i64: 1, 128>}, {pipeline_mode = #tpu.pipeline_mode<synchronous>, transform_indices = @transform_3, window_bounds = array<i64: 128, 128>}, {pipeline_mode = #tpu.pipeline_mode<synchronous>, transform_indices = @transform_4, window_bounds = array<i64: 1, 128>}, {transform_indices = @transform_5, window_bounds = array<i64: 8, 128>}]} {
    %c0 = arith.constant 0 : index
    %c0_0 = arith.constant 0 : index
    %0 = vector.load %arg1[%c0, %c0_0] : memref<8x128xbf16, #tpu.memory_space<vmem>>, vector<8x128xbf16>
    %c0_1 = arith.constant 0 : index
    %c0_2 = arith.constant 0 : index
    %1 = vector.load %arg2[%c0_1, %c0_2] : memref<128x128xbf16, #tpu.memory_space<vmem>>, vector<128x128xbf16>
    %cst = arith.constant dense<0.000000e+00> : vector<8x128xf32>
    %2 = tpu.matmul %0, %1, %cst {dimension_numbers = #tpu.dot_dimension_numbers<[1], [0], [0], [1], [0, 0, 1, 1], [], []>} : vector<8x128xbf16>, vector<128x128xbf16>, vector<8x128xf32> -> vector<8x128xf32>
    %c0_3 = arith.constant 0 : index
    %c0_4 = arith.constant 0 : index
    %3 = vector.load %arg3[%c0_3, %c0_4] : memref<1x128xf32, #tpu.memory_space<vmem>>, vector<1x128xf32>
    %4 = vector.broadcast %3 : vector<1x128xf32> to vector<8x128xf32>
    %5 = arith.addf %2, %4 : vector<8x128xf32>
    %cst_5 = arith.constant 0.000000e+00 : f32
    %6 = vector.broadcast %cst_5 : f32 to vector<8x128xf32>
    %7 = arith.maximumf %5, %6 : vector<8x128xf32>
    %8 = arith.truncf %7 : vector<8x128xf32> to vector<8x128xbf16>
    %c0_6 = arith.constant 0 : index
    %c0_7 = arith.constant 0 : index
    %9 = vector.load %arg4[%c0_6, %c0_7] : memref<128x128xbf16, #tpu.memory_space<vmem>>, vector<128x128xbf16>
    %cst_8 = arith.constant dense<0.000000e+00> : vector<8x128xf32>
    %10 = tpu.matmul %8, %9, %cst_8 {dimension_numbers = #tpu.dot_dimension_numbers<[1], [0], [0], [1], [0, 0, 1, 1], [], []>} : vector<8x128xbf16>, vector<128x128xbf16>, vector<8x128xf32> -> vector<8x128xf32>
    %c0_9 = arith.constant 0 : index
    %c0_10 = arith.constant 0 : index
    %11 = vector.load %arg5[%c0_9, %c0_10] : memref<1x128xf32, #tpu.memory_space<vmem>>, vector<1x128xf32>
    %12 = vector.broadcast %11 : vector<1x128xf32> to vector<8x128xf32>
    %13 = arith.addf %10, %12 : vector<8x128xf32>
    %c0_11 = arith.constant 0 : index
    %c0_12 = arith.constant 0 : index
    %14 = vector.load %arg6[%c0_11, %c0_12] : memref<8x128xf32, #tpu.memory_space<vmem>>, vector<8x128xf32>
    tpu.vector_store %arg6[%c0_11, %c0_12], %13 {strides = array<i32>} : memref<8x128xf32, #tpu.memory_space<vmem>>, vector<8x128xf32>,
    return
  }
  func.func @transform_0(%arg0: i32) -> (i32, i32) {
    %c0_i32 = arith.constant 0 : i32
    %c0_i32_0 = arith.constant 0 : i32
    return %arg0, %c0_i32 : i32, i32
  }
  func.func @transform_1(%arg0: i32) -> (i32, i32) {
    %c0_i32 = arith.constant 0 : i32
    %c0_i32_0 = arith.constant 0 : i32
    %c0_i32_1 = arith.constant 0 : i32
    return %c0_i32, %c0_i32_0 : i32, i32
  }
  func.func @transform_2(%arg0: i32) -> (i32, i32) {
    %c0_i32 = arith.constant 0 : i32
    %c0_i32_0 = arith.constant 0 : i32
    %c0_i32_1 = arith.constant 0 : i32
    return %c0_i32, %c0_i32_0 : i32, i32
  }
  func.func @transform_3(%arg0: i32) -> (i32, i32) {
    %c0_i32 = arith.constant 0 : i32
    %c0_i32_0 = arith.constant 0 : i32
    %c0_i32_1 = arith.constant 0 : i32
    return %c0_i32, %c0_i32_0 : i32, i32
  }
  func.func @transform_4(%arg0: i32) -> (i32, i32) {
    %c0_i32 = arith.constant 0 : i32
    %c0_i32_0 = arith.constant 0 : i32
    %c0_i32_1 = arith.constant 0 : i32
    return %c0_i32, %c0_i32_0 : i32, i32
  }
  func.func @transform_5(%arg0: i32) -> (i32, i32) {
    %c0_i32 = arith.constant 0 : i32
    %c0_i32_0 = arith.constant 0 : i32
    return %arg0, %c0_i32 : i32, i32
  }
}

</mosaic_0001>

<llo_original>
// kernel: tpu_custom_call.1
$region0: #{tpu_custom_call.1}
  #allocation0 [shape = 'u32[]', space=smem, size = 0x4, offset = 0x4, fixed_abs, tag = 'smem constant byte address 0x4 - core index']
  #allocation1 [shape = 'u32[72,128]{1,0:T(1,128)}', space=vmem, size = 0x9000, scoped, tag = 'internal scratch']
  %s0 = inlined_call_operand.hbm [shape: bf16[16,128], index: 0, kind: input, shape index: {}]
  %s1 = inlined_call_operand.hbm [shape: bf16[128,128], index: 1, kind: input, shape index: {}]
  %s2 = inlined_call_operand.vmem [shape: f32[1,128], index: 2, kind: input, shape index: {}]
  %s3 = inlined_call_operand.hbm [shape: bf16[128,128], index: 3, kind: input, shape index: {}]
  %s4 = inlined_call_operand.vmem [shape: f32[1,128], index: 4, kind: input, shape index: {}]
  %s5 = inlined_call_operand.hbm [shape: f32[16,128], index: 5, kind: output, shape index: {}]
  %s6 = sld [smem:[#allocation0]]
  $region65: #{tpu_custom_call.1} parent=0
    _
  %s8 = ssub.s32 1, %s6
  %s9 = scalar_select 0, %s8, %s6
  $region1: #{tpu_custom_call.1} parent=0
    #allocation2 [shape = 'u8[4096]{0}', space=vmem, size = 0x1000, scoped, tag = 'input window, operand 0']
    #allocation3 [shape = 's32[2]{0}', space=sflag, size = 0x8, scoped, tag = 'scoped memory for tpu_custom_call.1']
    #allocation4 [shape = 's32[2]{0}', space=sflag, size = 0x8, scoped, tag = 'scoped memory for tpu_custom_call.1']
    #allocation5 [shape = 'u8[32768]{0}', space=vmem, size = 0x8000, scoped, tag = 'input window, operand 1, single buffered']
    #allocation6 [shape = 's32[1]{0}', space=sflag, size = 0x4, scoped, tag = 'scoped memory for tpu_custom_call.1']
    #allocation7 [shape = 'u8[32768]{0}', space=vmem, size = 0x8000, scoped, tag = 'input window, operand 3, single buffered']
    #allocation8 [shape = 'u8[8192]{0}', space=vmem, size = 0x2000, scoped, tag = 'output window, operand 0']
    %10 = vsyncpa [#allocation3], 0
    %s11 = scalar_lea.sflag [#allocation3], 1
    %12 = vsyncpa %s11, 0
    %13 = vsyncpa [#allocation6], 0
    %14 = vsyncpa [#allocation4], 0
    %s15 = scalar_lea.sflag [#allocation4], 1
    %16 = vsyncpa %s15, 0
    loop: start=0, step=1, limit=4
    $region2: #{tpu_custom_call.1} parent=1 // loop_pre_header
      _
    $region3: #{tpu_custom_call.1} parent=1 // loop_header
      %s18 = sphi 0, %s22
      %p19 = scmp.ge.s32.totalorder %s18, 4
      %s28 = sphi 0, %s30
      %s31 = sphi 0, %s28
      %s32 = sphi 0, %s31
      %s48 = sphi 0, %s32
      %s52 = sphi 0, %s52
      %s54 = sphi 0, %s52
      %s55 = sphi 0, %s54
      %s69 = sphi 0, %s55
      %s73 = sphi 0, %s73
      %s75 = sphi 0, %s73
      %s76 = sphi 0, %s75
      %s90 = sphi 0, %s76
      %s94 = sphi 0, %s94
      %s96 = sphi 0, %s94
      %s97 = sphi 0, %s96
      %s111 = sphi 0, %s97
      %s115 = sphi 0, %s115
      %s117 = sphi 0, %s115
      %s118 = sphi 0, %s117
      %s132 = sphi 0, %s118
      %s138 = sphi 0, %s140
      %s141 = sphi 0, %s138
      %s142 = sphi 0, %s141
      %s158 = sphi 0, %s142
    $region4: #{tpu_custom_call.1} parent=1 // loop_header_branch
      %21 = sbr.rel (%p19) target = $region8
    $region5: #{tpu_custom_call.1} parent=1 // loop_body
      %s23 = ssub.s32 %s18, 1
      %s24 = ssub.s32 %s18, 2
      %s25 = sadd.s32 %s18, 1
      %s26 = ssub.s32 %s18, %s25
      %p27 = scmp.eq.s32.totalorder %s26, 0
      %s29 = sadd.s32 %s28, 1
      %s30 = scalar_select %p27, %s28, %s29
      %p33 = pneg %p27
      %p34 = scmp.eq.s32.totalorder %s18, 1
      %p35 = por %p33, %p34
      %p36 = scmp.ne.s32.totalorder %s28, %s31
      %p37 = scmp.eq.s32.totalorder %s18, 0
      %p38 = por %p36, %p37
      %p39 = scmp.ne.s32.totalorder %s28, %s31
      %p40 = scmp.eq.s32.totalorder %s23, 1
      %p41 = por %p39, %p40
      %p42 = scmp.ne.s32.totalorder %s31, %s32
      %p43 = scmp.eq.s32.totalorder %s23, 0
      %p44 = por %p42, %p43
      %p45 = scmp.ne.s32.totalorder %s31, %s32
      %p46 = scmp.eq.s32.totalorder %s24, 1
      %p47 = por %p45, %p46
      %p49 = scmp.ne.s32.totalorder %s32, %s48
      %p50 = scmp.eq.s32.totalorder %s24, 0
      %p51 = por %p49, %p50
      %s53 = sadd.s32 %s52, 1
      %p56 = scmp.eq.s32.totalorder %s18, 1
      %p57 = scmp.ne.s32.totalorder %s52, %s54
      %p58 = scmp.eq.s32.totalorder %s18, 0
      %p59 = por %p57, %p58
      %p60 = scmp.ne.s32.totalorder %s52, %s54
      %p61 = scmp.eq.s32.totalorder %s23, 1
      %p62 = por %p60, %p61
      %p63 = scmp.ne.s32.totalorder %s54, %s55
      %p64 = scmp.eq.s32.totalorder %s23, 0
      %p65 = por %p63, %p64
      %p66 = scmp.ne.s32.totalorder %s54, %s55
      %p67 = scmp.eq.s32.totalorder %s24, 1
      %p68 = por %p66, %p67
      %p70 = scmp.ne.s32.totalorder %s55, %s69
      %p71 = scmp.eq.s32.totalorder %s24, 0
      %p72 = por %p70, %p71
      %s74 = sadd.s32 %s73, 1
      %p77 = scmp.eq.s32.totalorder %s18, 1
      %p78 = scmp.ne.s32.totalorder %s73, %s75
      %p79 = scmp.eq.s32.totalorder %s18, 0
      %p80 = por %p78, %p79
      %p81 = scmp.ne.s32.totalorder %s73, %s75
      %p82 = scmp.eq.s32.totalorder %s23, 1
      %p83 = por %p81, %p82
      %p84 = scmp.ne.s32.totalorder %s75, %s76
      %p85 = scmp.eq.s32.totalorder %s23, 0
      %p86 = por %p84, %p85
      %p87 = scmp.ne.s32.totalorder %s75, %s76
      %p88 = scmp.eq.s32.totalorder %s24, 1
      %p89 = por %p87, %p88
      %p91 = scmp.ne.s32.totalorder %s76, %s90
      %p92 = scmp.eq.s32.totalorder %s24, 0
      %p93 = por %p91, %p92
      %s95 = sadd.s32 %s94, 1
      %p98 = scmp.eq.s32.totalorder %s18, 1
      %p99 = scmp.ne.s32.totalorder %s94, %s96
      %p100 = scmp.eq.s32.totalorder %s18, 0
      %p101 = por %p99, %p100
      %p102 = scmp.ne.s32.totalorder %s94, %s96
      %p103 = scmp.eq.s32.totalorder %s23, 1
      %p104 = por %p102, %p103
      %p105 = scmp.ne.s32.totalorder %s96, %s97
      %p106 = scmp.eq.s32.totalorder %s23, 0
      %p107 = por %p105, %p106
      %p108 = scmp.ne.s32.totalorder %s96, %s97
      %p109 = scmp.eq.s32.totalorder %s24, 1
      %p110 = por %p108, %p109
      %p112 = scmp.ne.s32.totalorder %s97, %s111
      %p113 = scmp.eq.s32.totalorder %s24, 0
      %p114 = por %p112, %p113
      %s116 = sadd.s32 %s115, 1
      %p119 = scmp.eq.s32.totalorder %s18, 1
      %p120 = scmp.ne.s32.totalorder %s115, %s117
      %p121 = scmp.eq.s32.totalorder %s18, 0
      %p122 = por %p120, %p121
      %p123 = scmp.ne.s32.totalorder %s115, %s117
      %p124 = scmp.eq.s32.totalorder %s23, 1
      %p125 = por %p123, %p124
      %p126 = scmp.ne.s32.totalorder %s117, %s118
      %p127 = scmp.eq.s32.totalorder %s23, 0
      %p128 = por %p126, %p127
      %p129 = scmp.ne.s32.totalorder %s117, %s118
      %p130 = scmp.eq.s32.totalorder %s24, 1
      %p131 = por %p129, %p130
      %p133 = scmp.ne.s32.totalorder %s118, %s132
      %p134 = scmp.eq.s32.totalorder %s24, 0
      %p135 = por %p133, %p134
      %s136 = ssub.s32 %s18, %s25
      %p137 = scmp.eq.s32.totalorder %s136, 0
      %s139 = sadd.s32 %s138, 1
      %s140 = scalar_select %p137, %s138, %s139
      %p143 = pneg %p137
      %p144 = scmp.eq.s32.totalorder %s18, 1
      %p145 = por %p143, %p144
      %p146 = scmp.ne.s32.totalorder %s138, %s141
      %p147 = scmp.eq.s32.totalorder %s18, 0
      %p148 = por %p146, %p147
      %p149 = scmp.ne.s32.totalorder %s138, %s141
      %p150 = scmp.eq.s32.totalorder %s23, 1
      %p151 = por %p149, %p150
      %p152 = scmp.ne.s32.totalorder %s141, %s142
      %p153 = scmp.eq.s32.totalorder %s23, 0
      %p154 = por %p152, %p153
      %p155 = scmp.ne.s32.totalorder %s141, %s142
      %p156 = scmp.eq.s32.totalorder %s24, 1
      %p157 = por %p155, %p156
      %p159 = scmp.ne.s32.totalorder %s142, %s158
      %p160 = scmp.eq.s32.totalorder %s24, 0
      %p161 = por %p159, %p160
      %p162 = scmp.le.s32.totalorder 1, %s18
      %p163 = scmp.lt.s32.totalorder %s18, 3
      %p164 = pnand %p162, %p163
      %p165 = pneg %p164
      // Predicated region
      $region9: #{tpu_custom_call.1} parent=5 // pred_check
        _
      $region10: #{tpu_custom_call.1} parent=5 // pred_check_branch
        %167 = sbr.rel (%p164) target = $region12
      $region11: #{tpu_custom_call.1} parent=5 // pred_region
        %s168 = ssub.s32 %s18, 1
        // Predicated region
        $region13: #{tpu_custom_call.1} parent=11 // pred_check
          %p169 = pneg %p65
        $region14: #{tpu_custom_call.1} parent=11 // pred_check_branch
          %171 = sbr.rel (%p169) target = $region16
        $region15: #{tpu_custom_call.1} parent=11 // pred_region
          %173 = vsyncadd [#allocation6], 0
          %s174 = sshll.u32 %s1, 4
          %s175 = int_to_ptr.hbm [resolvable:$true] %s174
          %s176 = sshll.u32 [#allocation5], 4
          %s177 = int_to_ptr.vmem [resolvable:$true] %s176
          %182 = dma.hbm_to_vmem [thread:$0]  %s175, 1024, %s177, [#allocation6], 64, 64, 4
        $region16: #{tpu_custom_call.1} parent=11 // pred_fallthru
          _
        // Predicated region
        $region17: #{tpu_custom_call.1} parent=11 // pred_check
          %p183 = pneg %p86
        $region18: #{tpu_custom_call.1} parent=11 // pred_check_branch
          %185 = sbr.rel (%p183) target = $region20
        $region19: #{tpu_custom_call.1} parent=11 // pred_region
          _
        $region20: #{tpu_custom_call.1} parent=11 // pred_fallthru
          _
        // Predicated region
        $region21: #{tpu_custom_call.1} parent=11 // pred_check
          %p186 = pneg %p107
        $region22: #{tpu_custom_call.1} parent=11 // pred_check_branch
          %188 = sbr.rel (%p186) target = $region24
        $region23: #{tpu_custom_call.1} parent=11 // pred_region
          %190 = vsyncadd [#allocation6], 0
          %s191 = sshll.u32 %s3, 4
          %s192 = int_to_ptr.hbm [resolvable:$true] %s191
          %s193 = sshll.u32 [#allocation7], 4
          %s194 = int_to_ptr.vmem [resolvable:$true] %s193
          %199 = dma.hbm_to_vmem [thread:$0]  %s192, 1024, %s194, [#allocation6], 64, 64, 4
        $region24: #{tpu_custom_call.1} parent=11 // pred_fallthru
          _
        // Predicated region
        $region25: #{tpu_custom_call.1} parent=11 // pred_check
          %p200 = pneg %p128
        $region26: #{tpu_custom_call.1} parent=11 // pred_check_branch
          %202 = sbr.rel (%p200) target = $region28
        $region27: #{tpu_custom_call.1} parent=11 // pred_region
          _
        $region28: #{tpu_custom_call.1} parent=11 // pred_fallthru
          _
      $region12: #{tpu_custom_call.1} parent=5 // pred_fallthru
        _
      %p203 = scmp.lt.s32.totalorder %s18, 2
      // Predicated region
      $region29: #{tpu_custom_call.1} parent=5 // pred_check
        %p204 = pneg %p203
      $region30: #{tpu_custom_call.1} parent=5 // pred_check_branch
        %206 = sbr.rel (%p204) target = $region32
      $region31: #{tpu_custom_call.1} parent=5 // pred_region
        // Predicated region
        $region33: #{tpu_custom_call.1} parent=31 // pred_check
          %p207 = pneg %p38
        $region34: #{tpu_custom_call.1} parent=31 // pred_check_branch
          %209 = sbr.rel (%p207) target = $region36
        $region35: #{tpu_custom_call.1} parent=31 // pred_region
          %s210 = sand.u32 %s28, 1
          %s211 = scalar_lea.sflag [#allocation3], %s210
          %s212 = sand.u32 %s28, 1
          %s213 = smul.addr %s212, 4
          %s214 = scalar_lea.vmem [#allocation2], %s213
          %216 = vsyncadd %s211, 0
          %s217 = smul.addr %s18, 4
          %s218 = scalar_lea.hbm %s0, %s217
          %s220 = sshll.u32 %s218, 4
          %s221 = int_to_ptr.hbm [resolvable:$true] %s220
          %s222 = sshll.u32 %s214, 4
          %s223 = int_to_ptr.vmem [resolvable:$true] %s222
          %225 = dma.hbm_to_vmem [thread:$0]  %s221, 64, %s223, %s211
        $region36: #{tpu_custom_call.1} parent=31 // pred_fallthru
          _
      $region32: #{tpu_custom_call.1} parent=5 // pred_fallthru
        _
      %p226 = scmp.le.s32.totalorder 1, %s18
      %p227 = scmp.lt.s32.totalorder %s18, 3
      %p228 = pnand %p226, %p227
      %p229 = pneg %p228
      // Predicated region
      $region37: #{tpu_custom_call.1} parent=5 // pred_check
        _
      $region38: #{tpu_custom_call.1} parent=5 // pred_check_branch
        %231 = sbr.rel (%p228) target = $region40
      $region39: #{tpu_custom_call.1} parent=5 // pred_region
        %s232 = ssub.s32 %s18, 1
        %s233 = sand.u32 %s31, 1
        %s234 = scalar_lea.sflag [#allocation3], %s233
        %s235 = sand.u32 %s31, 1
        %s236 = smul.addr %s235, 4
        %s237 = scalar_lea.vmem [#allocation2], %s236
        // Predicated region
        $region41: #{tpu_custom_call.1} parent=39 // pred_check
          %p238 = pneg %p44
        $region42: #{tpu_custom_call.1} parent=39 // pred_check_branch
          %240 = sbr.rel (%p238) target = $region44
        $region43: #{tpu_custom_call.1} parent=39 // pred_region
          %242 = dma.done %s234, 64
        $region44: #{tpu_custom_call.1} parent=39 // pred_fallthru
          _
        // Predicated region
        $region45: #{tpu_custom_call.1} parent=39 // pred_check
          %p243 = pneg %p65
        $region46: #{tpu_custom_call.1} parent=39 // pred_check_branch
          %245 = sbr.rel (%p243) target = $region48
        $region47: #{tpu_custom_call.1} parent=39 // pred_region
          %247 = dma.done [#allocation6], 1024
        $region48: #{tpu_custom_call.1} parent=39 // pred_fallthru
          _
        // Predicated region
        $region49: #{tpu_custom_call.1} parent=39 // pred_check
          %p248 = pneg %p107
        $region50: #{tpu_custom_call.1} parent=39 // pred_check_branch
          %250 = sbr.rel (%p248) target = $region52
        $region51: #{tpu_custom_call.1} parent=39 // pred_region
          %252 = dma.done [#allocation6], 1024
        $region52: #{tpu_custom_call.1} parent=39 // pred_fallthru
          _
        %s253 = sand.u32 %s31, 1
        %s254 = scalar_lea.sflag [#allocation3], %s253
        %s255 = sand.u32 %s31, 1
        %s256 = smul.addr %s255, 4
        %s257 = scalar_lea.vmem [#allocation2], %s256
        %p258 = pneg %p44
        %p259 = pneg %p41
        %p260 = pneg %p65
        %p261 = pneg %p62
        %p262 = pneg %p86
        %p263 = pneg %p83
        %p264 = pneg %p107
        %p265 = pneg %p104
        %p266 = pneg %p128
        %p267 = pneg %p125
        %p268 = pneg %p154
        %p269 = pneg %p151
        %s270 = sand.u32 %s141, 1
        %s271 = scalar_lea.sflag [#allocation4], %s270
        %s272 = sand.u32 %s141, 1
        %s273 = smul.addr %s272, 8
        %s274 = scalar_lea.vmem [#allocation8], %s273
        %v275 = vld [vmem:[%s237] sm:$0xf]
        %v276 = vld [vmem:[#allocation5] sm:$0xf]
        %v277 = vld [vmem:[#allocation5 + $0x4] sm:$0xf]
        %v278 = vld [vmem:[#allocation5 + $0x8] sm:$0xf]
        %v279 = vld [vmem:[#allocation5 + $0xc] sm:$0xf]
        %v280 = vld [vmem:[#allocation5 + $0x10] sm:$0xf]
        %v281 = vld [vmem:[#allocation5 + $0x14] sm:$0xf]
        %v282 = vld [vmem:[#allocation5 + $0x18] sm:$0xf]
        %v283 = vld [vmem:[#allocation5 + $0x1c] sm:$0xf]
        %v284 = vld [vmem:[#allocation5 + $0x20] sm:$0xf]
        %v285 = vld [vmem:[#allocation5 + $0x24] sm:$0xf]
        %v286 = vld [vmem:[#allocation5 + $0x28] sm:$0xf]
        %v287 = vld [vmem:[#allocation5 + $0x2c] sm:$0xf]
        %v288 = vld [vmem:[#allocation5 + $0x30] sm:$0xf]
        %v289 = vld [vmem:[#allocation5 + $0x34] sm:$0xf]
        %v290 = vld [vmem:[#allocation5 + $0x38] sm:$0xf]
        %v291 = vld [vmem:[#allocation5 + $0x3c] sm:$0xf]
        %v292 = vld [vmem:[%s2] sm:$0x1]
        %v294 = vperm.slane %v292, 0
        %v312 = vunpack.c.l.b16 %v276
        %v313 = vunpack.c.l.b16 %v277
        %v314 = vunpack.c.l.b16 %v278
        %v315 = vunpack.c.l.b16 %v279
        %v316 = vunpack.c.l.b16 %v280
        %v317 = vunpack.c.l.b16 %v281
        %v318 = vunpack.c.l.b16 %v282
        %v319 = vunpack.c.l.b16 %v283
        %v320 = vunpack.c.l.b16 %v284
        %v321 = vunpack.c.l.b16 %v285
        %v322 = vunpack.c.l.b16 %v286
        %v323 = vunpack.c.l.b16 %v287
        %v324 = vunpack.c.l.b16 %v288
        %v325 = vunpack.c.l.b16 %v289
        %v326 = vunpack.c.l.b16 %v290
        %v327 = vunpack.c.l.b16 %v291
        %v328 = vpack.c.b16 %v313, %v312
        %v329 = vpack.c.b16 %v315, %v314
        %v330 = vpack.c.b16 %v317, %v316
        %v331 = vpack.c.b16 %v319, %v318
        %v332 = vpack.c.b16 %v321, %v320
        %v333 = vpack.c.b16 %v323, %v322
        %v334 = vpack.c.b16 %v325, %v324
        %v335 = vpack.c.b16 %v327, %v326
        %344 = vmatpush.bf16.msra.mxu0 %v335
        %345 = vmatpush.bf16.msra.mxu0 %v334
        %346 = vmatpush.bf16.msra.mxu0 %v333
        %347 = vmatpush.bf16.msra.mxu0 %v332
        %348 = vmatpush.bf16.msra.mxu0 %v331
        %349 = vmatpush.bf16.msra.mxu0 %v330
        %350 = vmatpush.bf16.msra.mxu0 %v329
        %351 = vmatpush.bf16.msra.mxu0 %v328
        %352 = vmatmul.bf16.gmra.mxu0 %v275
        %v353 = vpop.f32.mrf.mxu0
        %v354 = vadd.f32 %v294, %v353
        %v355 = vpop.f32.mrf.mxu0
        %356 = vdwg.mxu0
        %v357 = vmax.f32 %v354, 0.0
        %v358 = vpack.c.bf16 %v357, %v357
        %v359 = vld [vmem:[#allocation7] sm:$0xf]
        %v360 = vld [vmem:[#allocation7 + $0x4] sm:$0xf]
        %v361 = vld [vmem:[#allocation7 + $0x8] sm:$0xf]
        %v362 = vld [vmem:[#allocation7 + $0xc] sm:$0xf]
        %v363 = vld [vmem:[#allocation7 + $0x10] sm:$0xf]
        %v364 = vld [vmem:[#allocation7 + $0x14] sm:$0xf]
        %v365 = vld [vmem:[#allocation7 + $0x18] sm:$0xf]
        %v366 = vld [vmem:[#allocation7 + $0x1c] sm:$0xf]
        %v367 = vld [vmem:[#allocation7 + $0x20] sm:$0xf]
        %v368 = vld [vmem:[#allocation7 + $0x24] sm:$0xf]
        %v369 = vld [vmem:[#allocation7 + $0x28] sm:$0xf]
        %v370 = vld [vmem:[#allocation7 + $0x2c] sm:$0xf]
        %v371 = vld [vmem:[#allocation7 + $0x30] sm:$0xf]
        %v372 = vld [vmem:[#allocation7 + $0x34] sm:$0xf]
        %v373 = vld [vmem:[#allocation7 + $0x38] sm:$0xf]
        %v374 = vld [vmem:[#allocation7 + $0x3c] sm:$0xf]
        %v375 = vld [vmem:[%s4] sm:$0x1]
        %v377 = vperm.slane %v375, 0
        %v395 = vunpack.c.l.b16 %v359
        %v396 = vunpack.c.l.b16 %v360
        %v397 = vunpack.c.l.b16 %v361
        %v398 = vunpack.c.l.b16 %v362
        %v399 = vunpack.c.l.b16 %v363
        %v400 = vunpack.c.l.b16 %v364
        %v401 = vunpack.c.l.b16 %v365
        %v402 = vunpack.c.l.b16 %v366
        %v403 = vunpack.c.l.b16 %v367
        %v404 = vunpack.c.l.b16 %v368
        %v405 = vunpack.c.l.b16 %v369
        %v406 = vunpack.c.l.b16 %v370
        %v407 = vunpack.c.l.b16 %v371
        %v408 = vunpack.c.l.b16 %v372
        %v409 = vunpack.c.l.b16 %v373
        %v410 = vunpack.c.l.b16 %v374
        %v411 = vpack.c.b16 %v396, %v395
        %v412 = vpack.c.b16 %v398, %v397
        %v413 = vpack.c.b16 %v400, %v399
        %v414 = vpack.c.b16 %v402, %v401
        %v415 = vpack.c.b16 %v404, %v403
        %v416 = vpack.c.b16 %v406, %v405
        %v417 = vpack.c.b16 %v408, %v407
        %v418 = vpack.c.b16 %v410, %v409
        %427 = vmatpush.bf16.msra.mxu0 %v418
        %428 = vmatpush.bf16.msra.mxu0 %v417
        %429 = vmatpush.bf16.msra.mxu0 %v416
        %430 = vmatpush.bf16.msra.mxu0 %v415
        %431 = vmatpush.bf16.msra.mxu0 %v414
        %432 = vmatpush.bf16.msra.mxu0 %v413
        %433 = vmatpush.bf16.msra.mxu0 %v412
        %434 = vmatpush.bf16.msra.mxu0 %v411
        %435 = vmatmul.bf16.gmra.mxu0 %v358
        %v436 = vpop.f32.mrf.mxu0
        %v437 = vadd.f32 %v377, %v436
        %v438 = vpop.f32.mrf.mxu0
        %439 = vdwg.mxu0
        %440 = vst [vmem:[%s274] sm:$0xff] %v437
        %s441 = sand.u32 %s141, 1
        %s442 = scalar_lea.sflag [#allocation4], %s441
        %s443 = sand.u32 %s141, 1
        %s444 = smul.addr %s443, 8
        %s445 = scalar_lea.vmem [#allocation8], %s444
        // Predicated region
        $region53: #{tpu_custom_call.1} parent=39 // pred_check
          %p446 = pneg %p151
        $region54: #{tpu_custom_call.1} parent=39 // pred_check_branch
          %448 = sbr.rel (%p446) target = $region56
        $region55: #{tpu_custom_call.1} parent=39 // pred_region
          %450 = vsyncadd %s442, 0
          %s451 = smul.addr %s23, 8
          %s452 = scalar_lea.hbm %s5, %s451
          %s454 = sshll.u32 %s445, 4
          %s455 = int_to_ptr.vmem [resolvable:$true] %s454
          %s456 = sshll.u32 %s452, 4
          %s457 = int_to_ptr.hbm [resolvable:$true] %s456
          %459 = dma.vmem_to_hbm [thread:$0]  %s455, 128, %s457, %s442
        $region56: #{tpu_custom_call.1} parent=39 // pred_fallthru
          _
      $region40: #{tpu_custom_call.1} parent=5 // pred_fallthru
        _
      %p460 = scmp.le.s32.totalorder 2, %s18
      // Predicated region
      $region57: #{tpu_custom_call.1} parent=5 // pred_check
        %p461 = pneg %p460
      $region58: #{tpu_custom_call.1} parent=5 // pred_check_branch
        %463 = sbr.rel (%p461) target = $region60
      $region59: #{tpu_custom_call.1} parent=5 // pred_region
        %s464 = ssub.s32 %s18, 2
        // Predicated region
        $region61: #{tpu_custom_call.1} parent=59 // pred_check
          %p465 = pneg %p157
        $region62: #{tpu_custom_call.1} parent=59 // pred_check_branch
          %467 = sbr.rel (%p465) target = $region64
        $region63: #{tpu_custom_call.1} parent=59 // pred_region
          %s468 = sand.u32 %s142, 1
          %s469 = scalar_lea.sflag [#allocation4], %s468
          %s470 = sand.u32 %s142, 1
          %s471 = smul.addr %s470, 8
          %s472 = scalar_lea.vmem [#allocation8], %s471
          %474 = dma.done %s469, 128
        $region64: #{tpu_custom_call.1} parent=59 // pred_fallthru
          _
      $region60: #{tpu_custom_call.1} parent=5 // pred_fallthru
        _
    $region6: #{tpu_custom_call.1} parent=1 // loop_footer
      %s22 = sadd.s32 1, %s18
    $region7: #{tpu_custom_call.1} parent=1 // loop_footer_branch
      %17 = sbr.rel target = $region3
    $region8: #{tpu_custom_call.1} parent=1 // loop_exit
      _
    %475 = vsyncpa [#allocation3], 1
    %s476 = scalar_lea.sflag [#allocation3], 1
    %477 = vsyncpa %s476, 1
    %478 = vsyncpa [#allocation6], 1
    %479 = vsyncpa [#allocation4], 1
    %s480 = scalar_lea.sflag [#allocation4], 1
    %481 = vsyncpa %s480, 1

</llo_original>
